<compile_context>
chip_gen: v6e
topology: v6e:2x2x1
jax: 0.10.0
libtpu: 0.0.40
codegen_flags: <defaults>
</compile_context>

<pallas_src>
import jax
import jax.numpy as jnp
from jax.experimental import pallas as pl
from jax.experimental.pallas import tpu as pltpu

LANES = 128
SUBLANES = 8
TARGET_BLOCK_BYTES = 2 * 1024 * 1024  # ~2 MiB DMA'd per grid step (review: 2-4 MiB)


def _num_tensorcores() -> int:
    """Megacore split only helps on multi-TensorCore chips (v7x)."""
    try:
        kind = str(getattr(jax.devices()[0], "device_kind", "")).lower()
        if "7" in kind:  # e.g. "tpu7x"
            return 2
    except Exception:
        pass
    return 1  # v5e / v6e: a size-2 'parallel' axis would just be a serial loop


def _default_tile_rows(dtype) -> int:
    """Rows per block so one block is ~TARGET_BLOCK_BYTES in the native dtype."""
    itemsize = jnp.dtype(dtype).itemsize
    gran = SUBLANES * max(1, 4 // max(1, itemsize))  # 8 f32 / 16 bf16 / 32 int8
    tr = TARGET_BLOCK_BYTES // (LANES * itemsize)
    return max(gran, (tr // gran) * gran)


# ----------------------------------------------------------------------------
# Reduction kernel: sum(x^2)  ('mse')  or  sum(x)  ('sum')
# ----------------------------------------------------------------------------
def _make_reduce_kernel(mode: str, tr: int, steps: int, valid_rows: int,
                        needs_mask: bool, last_blk: int):
    """Builds the reduction kernel for a (tr, 128) input block.

    Grid is (splits, steps); axis 0 is 'parallel' (megacore split on v7x),
    axis 1 is the sequential reduction over this split's row-blocks.
    """
    want_sq = (mode == "sq")

    def accumulate(acc, xv):
        v = xv * xv if want_sq else xv
        if tr % SUBLANES == 0 and tr >= SUBLANES:
            # Fold row-blocks into the resident (8,128) accumulator: pure
            # vreg-wise VALU adds, no cross-lane work per step.
            acc[...] += v.reshape(tr // SUBLANES, SUBLANES, LANES).sum(axis=0)
        else:
            # Tiny / ragged single-block case.
            acc[0:1, :] += jnp.sum(v, axis=0, keepdims=True)

    def kernel(x_ref, out_ref, acc):
        i = pl.program_id(1)
        blk = pl.program_id(0) * steps + i

        @pl.when(i == 0)
        def _init():
            acc[...] = jnp.zeros_like(acc)

        # Cast to f32 on the VPU (input DMA'd in its native dtype).
        xv = x_ref[...].astype(jnp.float32)  # (tr, LANES)

        if needs_mask:
            # Only the tail block (and any clamped-duplicate blocks) need the
            # row mask; keep the steady-state path mask-free.
            @pl.when(blk < last_blk)
            def _steady():
                accumulate(acc, xv)

            @pl.when(blk >= last_blk)
            def _tail():
                start = blk * tr
                row_ids = jax.lax.broadcasted_iota(jnp.int32, (tr, LANES), 0) + start
                accumulate(acc, jnp.where(row_ids < valid_rows, xv, 0.0))
        else:
            accumulate(acc, xv)

        @pl.when(i == pl.num_programs(1) - 1)
        def _finalize():
            # Lane-dense (1, 8, 128) store once per split; the final cross-lane
            # reduce of the tiny partial slab happens in JAX.
            out_ref[...] = acc[...][None]

    return kernel


def _reduce_slab(slab, mode: str, tile_rows: int, force_splits=None):
    """sum(slab**2) ('sq') or sum(slab) ('sum') for a lane-dense (rows,128) slab."""
    rows = slab.shape[0]
    itemsize = jnp.dtype(slab.dtype).itemsize
    gran = SUBLANES * max(1, 4 // max(1, itemsize))  # 8 f32 / 16 bf16 / 32 int8

    if rows <= tile_rows or rows <= 2 * gran:
        # Whole slab in one block (block dims == full dims, always legal).
        splits, steps, tr = 1, 1, rows
    else:
        tr = max(gran, (tile_rows // gran) * gran)
        total_blocks = pl.cdiv(rows, tr)
        want_splits = force_splits if force_splits is not None else _num_tensorcores()
        splits = 2 if (want_splits >= 2 and total_blocks >= 2) else 1
        steps = pl.cdiv(total_blocks, splits)
    needs_mask = (splits * steps * tr != rows)
    last_blk = pl.cdiv(rows, tr) - 1

    def in_index(c, i):
        # Clamp so no block index ever points past the array; the gated in-kernel
        # row mask zeroes clamped-duplicate / partial tail rows.
        return (jnp.minimum(c * steps + i, last_blk), 0)

    n_elems = rows * LANES
    cost = pl.CostEstimate(
        flops=(2 if mode == "sq" else 1) * n_elems,
        transcendentals=0,
        bytes_accessed=n_elems * itemsize + splits * SUBLANES * LANES * 4,
    )

    parts = pl.pallas_call(
        _make_reduce_kernel(mode, tr, steps, rows, needs_mask, last_blk),
        out_shape=jax.ShapeDtypeStruct((splits, SUBLANES, LANES), jnp.float32),
        grid=(splits, steps),
        in_specs=[pl.BlockSpec((tr, LANES), in_index)],
        out_specs=pl.BlockSpec((1, SUBLANES, LANES), lambda c, i: (c, 0, 0)),
        scratch_shapes=[pltpu.VMEM((SUBLANES, LANES), jnp.float32)],
        compiler_params=pltpu.CompilerParams(
            dimension_semantics=("parallel", "arbitrary"),
            vmem_limit_bytes=32 * 1024 * 1024,
        ),
        cost_estimate=cost,
    )(slab)

    return jnp.sum(parts)


def _reduce_impl(x, mode: str, tile_rows=None, force_splits=None):
    """Returns sum(x**2) ('sq') or sum(x) ('sum') as an f32 scalar."""
    flat = x.reshape(-1)  # free reshape; keep native dtype (no HBM cast pass)
    n = flat.shape[0]
    if n == 0:
        return jnp.float32(0.0)
    if tile_rows is None:
        tile_rows = _default_tile_rows(x.dtype)

    n_main = (n // LANES) * LANES  # lane-aligned prefix handled by the kernel
    total = jnp.float32(0.0)
    if n_main:
        main = flat if n_main == n else flat[:n_main]
        # TODO(synk): when n % 128 != 0 the prefix slice may materialize a copy;
        # a memory_space=pl.ANY manual-DMA tail block would avoid it entirely.
        slab = main.reshape(n_main // LANES, LANES)
        total = total + _reduce_slab(slab, mode, tile_rows, force_splits)
    if n_main != n:
        tail = flat[n_main:].astype(jnp.float32)  # < 128 elements
        total = total + (jnp.sum(tail * tail) if mode == "sq" else jnp.sum(tail))
    return total


# ----------------------------------------------------------------------------
# Differentiable wrappers (no backward kernel needed)
# ----------------------------------------------------------------------------
@jax.custom_vjp
def _sum_of_squares(x):
    return _reduce_impl(x, "sq")


def _sumsq_fwd(x):
    return _reduce_impl(x, "sq"), x


def _sumsq_bwd(x, g):
    return ((2.0 * g * x.astype(jnp.float32)).astype(x.dtype),)


_sum_of_squares.defvjp(_sumsq_fwd, _sumsq_bwd)


@jax.custom_vjp
def _sum_all(x):
    return _reduce_impl(x, "sum")


def _sum_fwd(x):
    return _reduce_impl(x, "sum"), x


def _sum_bwd(x, g):
    return (jnp.broadcast_to(g, x.shape).astype(x.dtype),)


_sum_all.defvjp(_sum_fwd, _sum_bwd)


# ----------------------------------------------------------------------------
# Module wrapper (mirrors PyTorch MeanPenaltyTerm.forward)
# ----------------------------------------------------------------------------
class MeanPenaltyTerm:
    def __init__(self, loss_type: str, mean_penalty_weight: float):
        self.loss_type = loss_type
        self.mean_penalty_weight = mean_penalty_weight

    def __call__(self, x: jax.Array) -> jax.Array:
        if self.loss_type == "mse":
            # F.mse_loss(x, zeros) == mean(x^2)
            mean_loss = (_sum_of_squares(x) / jnp.float32(x.size)).astype(x.dtype)
        elif self.loss_type == "cossim":
            # F.cosine_similarity(x, zeros, dim=1) == 0 identically (zero
            # numerator, eps-clamped denominator), so 1 - cossim == 1 with zero
            # gradient. Constant-folded: no transpose, no kernel, no HBM write.
            out_shape = x.shape[:1] + x.shape[2:]
            mean_loss = jnp.full(out_shape, 1.0, dtype=x.dtype)
        elif self.loss_type == "sum":
            mean_loss = _sum_all(x).astype(x.dtype)  # x.sum() preserves input dtype
        else:
            raise ValueError(f"unknown loss_type {self.loss_type}")
        return jnp.asarray(self.mean_penalty_weight, mean_loss.dtype) * mean_loss


if __name__ == "__main__":
    key = jax.random.PRNGKey(0)
    w = 0.5

    # --- Test A: module-sized input (single-block path) --------------------
    x = jax.random.normal(key, (2, 4, 16, 16), dtype=jnp.float32)  # NCHW

    out_mse = jax.block_until_ready(MeanPenaltyTerm("mse", w)(x))
    ref_mse = w * jnp.mean(x * x)
    assert jnp.allclose(out_mse, ref_mse, rtol=1e-5, atol=1e-6), (out_mse, ref_mse)

    out_sum = jax.block_until_ready(MeanPenaltyTerm("sum", w)(x))
    ref_sum = w * jnp.sum(x)
    assert jnp.allclose(out_sum, ref_sum, rtol=1e-5, atol=1e-4), (out_sum, ref_sum)

    out_cos = jax.block_until_ready(MeanPenaltyTerm("cossim", w)(x))
    ref_cos = w * jnp.ones((2, 16, 16), dtype=jnp.float32)
    assert out_cos.shape == (2, 16, 16)
    assert jnp.allclose(out_cos, ref_cos, rtol=1e-6, atol=1e-6)

    # Also works under jit (how it would be used inside a training step).
    out_mse_jit = jax.block_until_ready(jax.jit(lambda t: MeanPenaltyTerm("mse", w)(t))(x))
    assert jnp.allclose(out_mse_jit, ref_mse, rtol=1e-5, atol=1e-6)

    # --- Test B: larger input, single big block (rows <= tile_rows) --------
    xb = jax.random.normal(jax.random.PRNGKey(1), (4, 64, 36, 36), dtype=jnp.float32)
    out_mse_b = jax.block_until_ready(MeanPenaltyTerm("mse", w)(xb))
    ref_mse_b = w * jnp.mean(xb * xb)
    assert jnp.allclose(out_mse_b, ref_mse_b, rtol=1e-4, atol=1e-6), (out_mse_b, ref_mse_b)
    out_sum_b = jax.block_until_ready(MeanPenaltyTerm("sum", w)(xb))
    ref_sum_b = w * jnp.sum(xb)
    assert jnp.allclose(out_sum_b, ref_sum_b, rtol=1e-4, atol=1e-2), (out_sum_b, ref_sum_b)

    # --- Test C: ragged row count (non multiple-of-8 single block path) ----
    xc = jax.random.normal(jax.random.PRNGKey(2), (1, 3, 4, 128), dtype=jnp.float32)
    out_sum_c = jax.block_until_ready(MeanPenaltyTerm("sum", w)(xc))
    ref_sum_c = w * jnp.sum(xc)
    assert jnp.allclose(out_sum_c, ref_sum_c, rtol=1e-5, atol=1e-4), (out_sum_c, ref_sum_c)

    # --- Test D: bf16 input (native-dtype DMA, in-kernel cast, dtype kept) -
    xd = x.astype(jnp.bfloat16)
    out_sum_d = jax.block_until_ready(MeanPenaltyTerm("sum", w)(xd))
    ref_sum_d = (w * jnp.sum(xd.astype(jnp.float32))).astype(jnp.bfloat16)
    assert out_sum_d.dtype == jnp.bfloat16
    assert jnp.allclose(out_sum_d.astype(jnp.float32), ref_sum_d.astype(jnp.float32),
                        rtol=2e-2, atol=1e-1), (out_sum_d, ref_sum_d)

    # --- Test E: lane-ragged size (n % 128 != 0 -> kernel prefix + jnp tail)
    xe = jax.random.normal(jax.random.PRNGKey(3), (2, 5, 7, 7), dtype=jnp.float32)
    out_mse_e = jax.block_until_ready(MeanPenaltyTerm("mse", w)(xe))
    ref_mse_e = w * jnp.mean(xe * xe)
    assert jnp.allclose(out_mse_e, ref_mse_e, rtol=1e-5, atol=1e-6), (out_mse_e, ref_mse_e)
    out_sum_e = jax.block_until_ready(MeanPenaltyTerm("sum", w)(xe))
    ref_sum_e = w * jnp.sum(xe)
    assert jnp.allclose(out_sum_e, ref_sum_e, rtol=1e-5, atol=1e-4), (out_sum_e, ref_sum_e)

    # --- Test F: force multi-step grid + masked tail + 2-way split ---------
    ref_sq_b = jnp.sum(xb.astype(jnp.float32) ** 2)
    ref_s_b = jnp.sum(xb.astype(jnp.float32))
    got_sq_f = jax.block_until_ready(_reduce_impl(xb, "sq", tile_rows=256, force_splits=2))
    got_s_f = jax.block_until_ready(_reduce_impl(xb, "sum", tile_rows=256, force_splits=2))
    assert jnp.allclose(got_sq_f, ref_sq_b, rtol=1e-4), (got_sq_f, ref_sq_b)
    assert jnp.allclose(got_s_f, ref_s_b, rtol=1e-4, atol=1e-2), (got_s_f, ref_s_b)
    got_sq_g = jax.block_until_ready(_reduce_impl(xb, "sq", tile_rows=1024, force_splits=2))
    assert jnp.allclose(got_sq_g, ref_sq_b, rtol=1e-4), (got_sq_g, ref_sq_b)
    got_s_h = jax.block_until_ready(_reduce_impl(xb, "sum", tile_rows=256, force_splits=1))
    assert jnp.allclose(got_s_h, ref_s_b, rtol=1e-4, atol=1e-2), (got_s_h, ref_s_b)

    # --- Test G: gradients via custom_vjp (mse and sum paths) --------------
    grad_mse = jax.block_until_ready(jax.grad(lambda t: MeanPenaltyTerm("mse", w)(t))(x))
    ref_grad_mse = w * 2.0 * x / x.size
    assert jnp.allclose(grad_mse, ref_grad_mse, rtol=1e-5, atol=1e-7)
    grad_sum = jax.block_until_ready(jax.grad(lambda t: MeanPenaltyTerm("sum", w)(t))(x))
    assert jnp.allclose(grad_sum, jnp.full_like(x, w), rtol=1e-6, atol=1e-7)

    print("KERNEL_OK")
</pallas_src>

<mosaic_0001>
module attributes {stable_mosaic.version = 11 : i64} {
  func.func @kernel(%arg0: i32, %arg1: i32, %arg2: memref<16x128xf32, #tpu.memory_space<vmem>>, %arg3: memref<1x8x128xf32, #tpu.memory_space<vmem>>, %arg4: memref<8x128xf32, #tpu.memory_space<vmem>>) attributes {dimension_semantics = [#tpu.dimension_semantics<parallel>, #tpu.dimension_semantics<arbitrary>], iteration_bounds = array<i64: 1, 1>, scalar_prefetch = 0 : i64, scratch_operands = 1 : i64, tpu.core_type = #tpu.core_type<tc>, window_params = [{transform_indices = @transform_0, window_bounds = array<i64: 16, 128>}, {transform_indices = @transform_1, window_bounds = array<i64: 1, 8, 128>}]} {
    %c0_i32 = arith.constant 0 : i32
    %0 = arith.cmpi eq, %arg1, %c0_i32 : i32
    %1 = arith.extui %0 : i1 to i32
    %c0_i32_0 = arith.constant 0 : i32
    %2 = arith.cmpi ne, %1, %c0_i32_0 : i32
    scf.if %2 {
      %cst_8 = arith.constant 0.000000e+00 : f32
      %13 = vector.broadcast %cst_8 : f32 to vector<8x128xf32>
      %c0_9 = arith.constant 0 : index
      %c0_10 = arith.constant 0 : index
      %14 = vector.load %arg4[%c0_9, %c0_10] : memref<8x128xf32, #tpu.memory_space<vmem>>, vector<8x128xf32>
      tpu.vector_store %arg4[%c0_9, %c0_10], %13 {strides = array<i32>} : memref<8x128xf32, #tpu.memory_space<vmem>>, vector<8x128xf32>,
    } else {
    }
    %c0 = arith.constant 0 : index
    %c0_1 = arith.constant 0 : index
    %3 = vector.load %arg2[%c0, %c0_1] : memref<16x128xf32, #tpu.memory_space<vmem>>, vector<16x128xf32>
    %4 = arith.mulf %3, %3 : vector<16x128xf32>
    %c0_2 = arith.constant 0 : index
    %c0_3 = arith.constant 0 : index
    %5 = vector.load %arg4[%c0_2, %c0_3] : memref<8x128xf32, #tpu.memory_space<vmem>>, vector<8x128xf32>
    %6 = vector.shape_cast %4 : vector<16x128xf32> to vector<2x8x128xf32>
    %cst = arith.constant dense<0.000000e+00> : vector<8x128xf32>
    %7 = vector.multi_reduction <add>, %6, %cst [0] : vector<2x8x128xf32> to vector<8x128xf32>
    %8 = arith.addf %5, %7 : vector<8x128xf32>
    %c0_4 = arith.constant 0 : index
    %c0_5 = arith.constant 0 : index
    %9 = vector.load %arg4[%c0_4, %c0_5] : memref<8x128xf32, #tpu.memory_space<vmem>>, vector<8x128xf32>
    tpu.vector_store %arg4[%c0_4, %c0_5], %8 {strides = array<i32>} : memref<8x128xf32, #tpu.memory_space<vmem>>, vector<8x128xf32>,
    %c0_i32_6 = arith.constant 0 : i32
    %10 = arith.cmpi eq, %arg1, %c0_i32_6 : i32
    %11 = arith.extui %10 : i1 to i32
    %c0_i32_7 = arith.constant 0 : i32
    %12 = arith.cmpi ne, %11, %c0_i32_7 : i32
    scf.if %12 {
      %c0_8 = arith.constant 0 : index
      %c0_9 = arith.constant 0 : index
      %13 = vector.load %arg4[%c0_8, %c0_9] : memref<8x128xf32, #tpu.memory_space<vmem>>, vector<8x128xf32>
      %14 = vector.shape_cast %13 : vector<8x128xf32> to vector<1x8x128xf32>
      %c0_10 = arith.constant 0 : index
      %c0_11 = arith.constant 0 : index
      %c0_12 = arith.constant 0 : index
      %15 = vector.load %arg3[%c0_10, %c0_11, %c0_12] : memref<1x8x128xf32, #tpu.memory_space<vmem>>, vector<1x8x128xf32>
      tpu.vector_store %arg3[%c0_10, %c0_11, %c0_12], %14 {strides = array<i32>} : memref<1x8x128xf32, #tpu.memory_space<vmem>>, vector<1x8x128xf32>,
    } else {
    }
    return
  }
  func.func @transform_0(%arg0: i32, %arg1: i32) -> (i32, i32) {
    %c1_i32 = arith.constant 1 : i32
    %0 = arith.muli %arg0, %c1_i32 : i32
    %1 = arith.addi %0, %arg1 : i32
    %c0_i32 = arith.constant 0 : i32
    %2 = arith.minsi %1, %c0_i32 : i32
    %c0_i32_0 = arith.constant 0 : i32
    %c0_i32_1 = arith.constant 0 : i32
    return %2, %c0_i32_0 : i32, i32
  }
  func.func @transform_1(%arg0: i32, %arg1: i32) -> (i32, i32, i32) {
    %c0_i32 = arith.constant 0 : i32
    %c0_i32_0 = arith.constant 0 : i32
    %c0_i32_1 = arith.constant 0 : i32
    return %arg0, %c0_i32, %c0_i32_0 : i32, i32, i32
  }
}

</mosaic_0001>

<llo_original>
// kernel: tpu_custom_call.1
$region0: #{tpu_custom_call.1}
  #allocation0 [shape = 'u32[]', space=smem, size = 0x4, offset = 0x4, fixed_abs, tag = 'smem constant byte address 0x4 - core index']
  #allocation1 [shape = 'u32[144,128]{1,0:T(1,128)}', space=vmem, size = 0x12000, scoped, tag = 'internal scratch']
  #allocation2 [shape = 'f32[8,128]{1,0:T(8,128)}', space=vmem, size = 0x1000, scoped, tag = 'scratch operand']
  %s0 = inlined_call_operand.hbm [shape: f32[16,128], index: 0, kind: input, shape index: {}]
  %s1 = inlined_call_operand.hbm [shape: f32[1,8,128], index: 1, kind: output, shape index: {}]
  %s2 = sld [smem:[#allocation0]]
  $region26: #{tpu_custom_call.1} parent=0
    _
  %s4 = ssub.s32 1, %s2
  %s5 = scalar_select 0, %s4, %s2
  $region1: #{tpu_custom_call.1} parent=0
    #allocation3 [shape = 'u8[8192]{0}', space=vmem, size = 0x2000, scoped, tag = 'input window, operand 0, single buffered']
    #allocation4 [shape = 's32[1]{0}', space=sflag, size = 0x4, scoped, tag = 'scoped memory for tpu_custom_call.1']
    #allocation5 [shape = 's32[1]{0}', space=sflag, size = 0x4, scoped, tag = 'scoped memory for tpu_custom_call.1']
    #allocation6 [shape = 'u8[4096]{0}', space=vmem, size = 0x1000, scoped, tag = 'output window, operand 0, single buffered']
    %6 = vsyncpa [#allocation4], 0
    %7 = vsyncpa [#allocation5], 0
    // Predicated region
    $region2: #{tpu_custom_call.1} parent=1 // pred_check
      _
    $region3: #{tpu_custom_call.1} parent=1 // pred_check_branch
      %9 = sbr.rel (0) target = $region5
    $region4: #{tpu_custom_call.1} parent=1 // pred_region
      %s10 = sadd.s32 0, 0
      %p11 = scmp.lt.s32.totalorder %s10, 0
      %s12 = scalar_select %p11, %s10, 0
      %s13 = smul.u32 2, %s12
      %s15 = ssub.s32 256, 256
      %16 = vsyncadd [#allocation4], %s15
      %s17 = smul.addr %s13, 128
      %s18 = scalar_lea.hbm %s0, %s17
      %s19 = sshll.u32 [#allocation3], 4
      %s20 = int_to_ptr.vmem [resolvable:$true] %s19
      %25 = dma.hbm_to_vmem [thread:$0]  %s18, 256, %s20, [#allocation4], 128, 128, 8
    $region5: #{tpu_custom_call.1} parent=1 // pred_fallthru
      _
    // Predicated region
    $region6: #{tpu_custom_call.1} parent=1 // pred_check
      _
    $region7: #{tpu_custom_call.1} parent=1 // pred_check_branch
      %27 = sbr.rel (0) target = $region9
    $region8: #{tpu_custom_call.1} parent=1 // pred_region
      %28 = dma.done [#allocation4], 256
    $region9: #{tpu_custom_call.1} parent=1 // pred_fallthru
      _
    %s29 = sadd.s32 0, 0
    %p30 = scmp.lt.s32.totalorder %s29, 0
    %s31 = scalar_select %p30, %s29, 0
    %s32 = smul.u32 2, %s31
    %p33 = scmp.eq.s32.totalorder 0, 0
    // Predicated region
    $region10: #{tpu_custom_call.1} parent=1 // pred_check
      %p34 = pneg %p33
    $region11: #{tpu_custom_call.1} parent=1 // pred_check_branch
      %36 = sbr.rel (%p34) target = $region13
    $region12: #{tpu_custom_call.1} parent=1 // pred_region
      %37 = vst [vmem:[#allocation2] sm:$0xff] 0.0
    $region13: #{tpu_custom_call.1} parent=1 // pred_fallthru
      _
    %v38 = vld [vmem:[#allocation3] sm:$0xff]
    %v39 = vld [vmem:[#allocation3 + $0x8] sm:$0xff]
    %v40 = vmul.f32 %v38, %v38
    %v41 = vmul.f32 %v39, %v39
    %v42 = vld [vmem:[#allocation2] sm:$0xff]
    %v43 = vadd.f32 %v40, %v41
    %v44 = vadd.f32 %v42, %v43
    %45 = vst [vmem:[#allocation2] sm:$0xff] %v44
    // Predicated region
    $region14: #{tpu_custom_call.1} parent=1 // pred_check
      %p46 = pneg %p33
    $region15: #{tpu_custom_call.1} parent=1 // pred_check_branch
      %48 = sbr.rel (%p46) target = $region17
    $region16: #{tpu_custom_call.1} parent=1 // pred_region
      %v49 = vld [vmem:[#allocation2] sm:$0xff]
      %50 = vst [vmem:[#allocation6] sm:$0xff] %v49
    $region17: #{tpu_custom_call.1} parent=1 // pred_fallthru
      _
    // Predicated region
    $region18: #{tpu_custom_call.1} parent=1 // pred_check
      _
    $region19: #{tpu_custom_call.1} parent=1 // pred_check_branch
      %52 = sbr.rel (0) target = $region21
    $region20: #{tpu_custom_call.1} parent=1 // pred_region
      %s54 = ssub.s32 128, 128
      %55 = vsyncadd [#allocation5], %s54
      %s57 = sshll.u32 [#allocation6], 4
      %s58 = int_to_ptr.vmem [resolvable:$true] %s57
      %60 = dma.vmem_to_hbm [thread:$0]  %s58, 128, %s1, [#allocation5]
    $region21: #{tpu_custom_call.1} parent=1 // pred_fallthru
      _
    // Predicated region
    $region22: #{tpu_custom_call.1} parent=1 // pred_check
      _
    $region23: #{tpu_custom_call.1} parent=1 // pred_check_branch
      %62 = sbr.rel (0) target = $region25
    $region24: #{tpu_custom_call.1} parent=1 // pred_region
      %63 = dma.done [#allocation5], 128
    $region25: #{tpu_custom_call.1} parent=1 // pred_fallthru
      _
    %64 = vsyncpa [#allocation4], 1
    %65 = vsyncpa [#allocation5], 1

</llo_original>
